<compile_context>
chip_gen: v7x
topology: tpu7x:2x2x1
jax: 0.10.0
libtpu: 0.0.40
codegen_flags: <defaults>
</compile_context>

<pallas_src>
import jax
import jax.numpy as jnp
from jax.experimental import pallas as pl
from jax.experimental.pallas import tpu as pltpu

LANES = 128
SUBLANES = 8
CHUNK_ROWS = 1024                      # inner-loop chunk (512 KiB of f32 values)
TARGET_BLOCK_BYTES = 4 * 1024 * 1024   # per-input DMA block (~8 MiB/step total)
VMEM_LIMIT_BYTES = 32 * 1024 * 1024    # 2 inputs x 2 bufs x 4 MiB = 16 MiB + slack


def _round_up(x, m):
    return (x + m - 1) // m * m


def _num_core_slices():
    """2 on v7x-class chips (2 TensorCores/chip); 1 elsewhere (the extra grid
    axis is a pure-overhead serial loop on single-TC v5e/v6e)."""
    try:
        kind = jax.devices()[0].device_kind.lower()
    except Exception:
        return 1
    return 2 if "v7" in kind else 1


def _make_kernel(num_slices, tile_rows, chunk_rows, rows, tiles_total,
                 tiles_per_slice):
    n_chunks = tile_rows // chunk_rows
    groups = chunk_rows // SUBLANES
    need_tile_mask = num_slices * tiles_per_slice != tiles_total
    need_row_mask = (rows % tile_rows != 0) or need_tile_mask
    full_tile = n_chunks == 1

    def kernel(pred_ref, tgt_ref, out_ref):
        if num_slices > 1:
            s = pl.program_id(0)   # core slice (v7x only)
            i = pl.program_id(1)   # reduction step within the slice
        else:
            s = 0
            i = pl.program_id(0)
        tile = s * tiles_per_slice + i

        @pl.when(i == 0)
        def _():
            out_ref[...] = jnp.zeros_like(out_ref)

        def chunk_body(c, carry):
            acc_sum, acc_cnt = carry
            if full_tile:
                t = tgt_ref[...].astype(jnp.float32)
                p = pred_ref[...].astype(jnp.float32)
            else:
                r0 = c * chunk_rows
                if not isinstance(r0, int):
                    r0 = pl.multiple_of(r0, chunk_rows)
                t = tgt_ref[pl.ds(r0, chunk_rows), :].astype(jnp.float32)
                p = pred_ref[pl.ds(r0, chunk_rows), :].astype(jnp.float32)
            mask = t > 0.0
            if need_row_mask:
                tile_c = jnp.minimum(tile, tiles_total - 1)
                row_ids = (tile_c * tile_rows + c * chunk_rows
                           + jax.lax.broadcasted_iota(
                               jnp.int32, (chunk_rows, LANES), 0))
                valid = row_ids < rows
                if need_tile_mask:
                    valid = jnp.logical_and(valid, tile < tiles_total)
                mask = jnp.logical_and(mask, valid)
            d = t - p
            # Keep the where-zeroing: ragged / clamped-duplicate blocks may
            # contain garbage (even NaN) that the select must suppress.
            sq = jnp.where(mask, d * d, 0.0)
            cnt = jnp.where(mask, 1.0, 0.0)
            # Pure VPU accumulation into vreg-shaped slabs; no cross-lane reduce.
            acc_sum = acc_sum + sq.reshape(groups, SUBLANES, LANES).sum(axis=0)
            acc_cnt = acc_cnt + cnt.reshape(groups, SUBLANES, LANES).sum(axis=0)
            return acc_sum, acc_cnt

        zero = jnp.zeros((SUBLANES, LANES), jnp.float32)
        if full_tile:
            acc_sum, acc_cnt = chunk_body(0, (zero, zero))
        else:
            acc_sum, acc_cnt = jax.lax.fori_loop(
                0, n_chunks, chunk_body, (zero, zero))
        out_ref[0, 0] = out_ref[0, 0] + acc_sum
        out_ref[0, 1] = out_ref[0, 1] + acc_cnt

    return kernel


def _masked_sums_ref(pred_1d, tgt_1d):
    t = tgt_1d.astype(jnp.float32)
    p = pred_1d.astype(jnp.float32)
    m = t > 0.0
    d = jnp.where(m, t - p, 0.0)
    return jnp.sum(d * d), jnp.sum(m.astype(jnp.float32))


def masked_mse_loss(pred, target):
    assert pred.ndim == target.ndim, "inconsistent dimensions"
    assert pred.shape == target.shape

    n = pred.size
    pred_f = pred.reshape(-1)     # free reshape for contiguous inputs
    tgt_f = target.reshape(-1)

    rem = n % LANES
    n_main = n - rem

    tail_sum = jnp.float32(0.0)
    tail_cnt = jnp.float32(0.0)
    if rem:
        # <128-element tail reduced in plain JAX; avoids a full-array jnp.pad
        # read+write pass just for lane alignment.
        # TODO(synk): a fully copy-free variant would stream the 1-D array and
        # mask by flat element index in-kernel (prefix slice is still a copy).
        tail_sum, tail_cnt = _masked_sums_ref(pred_f[n_main:], tgt_f[n_main:])

    if n_main == 0:
        return (tail_sum / tail_cnt).astype(jnp.float32)

    pred_main = pred_f[:n_main] if rem else pred_f
    tgt_main = tgt_f[:n_main] if rem else tgt_f

    rows = n_main // LANES
    pred2d = pred_main.reshape(rows, LANES)
    tgt2d = tgt_main.reshape(rows, LANES)

    itemsize = max(jnp.dtype(pred.dtype).itemsize,
                   jnp.dtype(target.dtype).itemsize)

    if rows < CHUNK_ROWS:
        # Small input: one full-extent block; tiny pad to a sublane multiple so
        # the (groups, 8, 128) reshape is legal.  Padded target rows are 0 ->
        # excluded by the (target > 0) mask.
        rows_p = _round_up(rows, SUBLANES)
        if rows_p != rows:
            pred2d = jnp.pad(pred2d, ((0, rows_p - rows), (0, 0)))
            tgt2d = jnp.pad(tgt2d, ((0, rows_p - rows), (0, 0)))
            rows = rows_p
        tile_rows = rows
        chunk_rows = rows
    else:
        # Streaming input: block rows from a per-input byte budget scaled by
        # the native itemsize (f32 -> 8192 rows, bf16 -> 16384, ...), as a
        # multiple of CHUNK_ROWS and never larger than the array.
        budget_rows = TARGET_BLOCK_BYTES // (LANES * itemsize)
        budget_rows = max(CHUNK_ROWS, budget_rows // CHUNK_ROWS * CHUNK_ROWS)
        tile_rows = min(budget_rows, (rows // CHUNK_ROWS) * CHUNK_ROWS)
        chunk_rows = CHUNK_ROWS

    tiles_total = pl.cdiv(rows, tile_rows)
    num_slices = min(_num_core_slices(), tiles_total)
    tiles_per_slice = pl.cdiv(tiles_total, num_slices)

    kernel = _make_kernel(num_slices, tile_rows, chunk_rows, rows,
                          tiles_total, tiles_per_slice)

    if num_slices > 1:
        grid = (num_slices, tiles_per_slice)

        def in_map(s, i):
            # Clamp so every block index is in-bounds; clamped duplicate tiles
            # are fully masked in-kernel.
            return (jnp.minimum(s * tiles_per_slice + i, tiles_total - 1), 0)

        out_map = lambda s, i: (s, 0, 0, 0)
        # Guarantee the 2-TensorCore split on v7x.
        dims = (getattr(pltpu, "CORE_PARALLEL", "parallel"),
                getattr(pltpu, "ARBITRARY", "arbitrary"))
    else:
        grid = (tiles_total,)
        in_map = lambda i: (i, 0)
        out_map = lambda i: (0, 0, 0, 0)
        dims = ("arbitrary",)

    out = pl.pallas_call(
        kernel,
        out_shape=jax.ShapeDtypeStruct((num_slices, 2, SUBLANES, LANES),
                                       jnp.float32),
        grid_spec=pltpu.PrefetchScalarGridSpec(
            num_scalar_prefetch=0,
            grid=grid,
            in_specs=[
                pl.BlockSpec((tile_rows, LANES), in_map),
                pl.BlockSpec((tile_rows, LANES), in_map),
            ],
            out_specs=pl.BlockSpec((1, 2, SUBLANES, LANES), out_map),
        ),
        compiler_params=pltpu.CompilerParams(
            dimension_semantics=dims,
            vmem_limit_bytes=VMEM_LIMIT_BYTES),
    )(pred2d, tgt2d)

    totals = out.sum(axis=(0, 2, 3))   # (2,): [masked sum of squares, count]
    total_sum = totals[0] + tail_sum
    total_cnt = totals[1] + tail_cnt
    # loss = sum / count (NaN if no valid element, matching torch mean of empty)
    return (total_sum / total_cnt).astype(jnp.float32)


if __name__ == "__main__":
    key = jax.random.PRNGKey(0)
    k1, k2, k3, k4 = jax.random.split(key, 4)

    def ref_loss(pred, target):
        mask = target > 0
        diff = jnp.where(mask, target - pred, 0.0)
        return jnp.sum(diff * diff) / jnp.sum(mask.astype(jnp.float32))

    # Test 1: small NCHW input (single full-extent block path).
    pred1 = jax.random.normal(k1, (2, 4, 16, 16), dtype=jnp.float32)
    target1 = jax.random.normal(k2, (2, 4, 16, 16), dtype=jnp.float32)
    loss1 = masked_mse_loss(pred1, target1)
    jax.block_until_ready(loss1)
    assert jnp.allclose(loss1, ref_loss(pred1, target1),
                        rtol=1e-5, atol=1e-6), (loss1, ref_loss(pred1, target1))

    # Test 2: depth-map-sized input exercising the streaming path
    # (multi-tile grid, inner chunk loop, ragged-row masking).
    pred2 = jax.random.normal(k3, (2, 1, 400, 400), dtype=jnp.float32)
    target2 = jax.random.normal(k4, (2, 1, 400, 400), dtype=jnp.float32)
    loss2 = masked_mse_loss(pred2, target2)
    jax.block_until_ready(loss2)
    assert jnp.allclose(loss2, ref_loss(pred2, target2),
                        rtol=1e-4, atol=1e-6), (loss2, ref_loss(pred2, target2))

    print("KERNEL_OK")
</pallas_src>

<mosaic_0001>
module attributes {stable_mosaic.version = 11 : i64} {
  func.func @kernel(%arg0: i32, %arg1: memref<16x128xf32, #tpu.memory_space<vmem>>, %arg2: memref<16x128xf32, #tpu.memory_space<vmem>>, %arg3: memref<1x2x8x128xf32, #tpu.memory_space<vmem>>) attributes {dimension_semantics = [#tpu.dimension_semantics<arbitrary>], iteration_bounds = array<i64: 1>, scalar_prefetch = 0 : i64, scratch_operands = 0 : i64, tpu.core_type = #tpu.core_type<tc>, window_params = [{transform_indices = @transform_0, window_bounds = array<i64: 16, 128>}, {transform_indices = @transform_1, window_bounds = array<i64: 16, 128>}, {pipeline_mode = #tpu.pipeline_mode<synchronous>, transform_indices = @transform_2, window_bounds = array<i64: 1, 2, 8, 128>}]} {
    %c0_i32 = arith.constant 0 : i32
    %0 = arith.cmpi eq, %arg0, %c0_i32 : i32
    %1 = arith.extui %0 : i1 to i32
    %c0_i32_0 = arith.constant 0 : i32
    %2 = arith.cmpi ne, %1, %c0_i32_0 : i32
    scf.if %2 {
      %cst_25 = arith.constant 0.000000e+00 : f32
      %33 = vector.broadcast %cst_25 : f32 to vector<1x2x8x128xf32>
      %c0_26 = arith.constant 0 : index
      %c0_27 = arith.constant 0 : index
      %c0_28 = arith.constant 0 : index
      %c0_29 = arith.constant 0 : index
      %34 = vector.load %arg3[%c0_26, %c0_27, %c0_28, %c0_29] : memref<1x2x8x128xf32, #tpu.memory_space<vmem>>, vector<1x2x8x128xf32>
      tpu.vector_store %arg3[%c0_26, %c0_27, %c0_28, %c0_29], %33 {strides = array<i32>} : memref<1x2x8x128xf32, #tpu.memory_space<vmem>>, vector<1x2x8x128xf32>,
    } else {
    }
    %cst = arith.constant 0.000000e+00 : f32
    %3 = vector.broadcast %cst : f32 to vector<8x128xf32>
    %c0 = arith.constant 0 : index
    %c0_1 = arith.constant 0 : index
    %4 = vector.load %arg2[%c0, %c0_1] : memref<16x128xf32, #tpu.memory_space<vmem>>, vector<16x128xf32>
    %c0_2 = arith.constant 0 : index
    %c0_3 = arith.constant 0 : index
    %5 = vector.load %arg1[%c0_2, %c0_3] : memref<16x128xf32, #tpu.memory_space<vmem>>, vector<16x128xf32>
    %cst_4 = arith.constant 0.000000e+00 : f32
    %6 = vector.broadcast %cst_4 : f32 to vector<16x128xf32>
    %7 = arith.cmpf ogt, %4, %6 : vector<16x128xf32>
    %8 = arith.subf %4, %5 : vector<16x128xf32>
    %9 = arith.mulf %8, %8 : vector<16x128xf32>
    %cst_5 = arith.constant 0.000000e+00 : f32
    %10 = vector.broadcast %cst_5 : f32 to vector<16x128xf32>
    %11 = arith.select %7, %9, %10 : vector<16x128xi1>, vector<16x128xf32>
    %cst_6 = arith.constant 1.000000e+00 : f32
    %cst_7 = arith.constant 0.000000e+00 : f32
    %12 = vector.broadcast %cst_6 : f32 to vector<16x128xf32>
    %13 = vector.broadcast %cst_7 : f32 to vector<16x128xf32>
    %14 = arith.select %7, %12, %13 : vector<16x128xi1>, vector<16x128xf32>
    %15 = vector.shape_cast %11 : vector<16x128xf32> to vector<2x8x128xf32>
    %cst_8 = arith.constant dense<0.000000e+00> : vector<8x128xf32>
    %16 = vector.multi_reduction <add>, %15, %cst_8 [0] : vector<2x8x128xf32> to vector<8x128xf32>
    %17 = arith.addf %3, %16 : vector<8x128xf32>
    %18 = vector.shape_cast %14 : vector<16x128xf32> to vector<2x8x128xf32>
    %cst_9 = arith.constant dense<0.000000e+00> : vector<8x128xf32>
    %19 = vector.multi_reduction <add>, %18, %cst_9 [0] : vector<2x8x128xf32> to vector<8x128xf32>
    %20 = arith.addf %3, %19 : vector<8x128xf32>
    %c0_10 = arith.constant 0 : index
    %c0_11 = arith.constant 0 : index
    %c0_12 = arith.constant 0 : index
    %c0_13 = arith.constant 0 : index
    %21 = vector.load %arg3[%c0_10, %c0_11, %c0_12, %c0_13] : memref<1x2x8x128xf32, #tpu.memory_space<vmem>>, vector<1x1x8x128xf32>
    %22 = vector.shape_cast %21 : vector<1x1x8x128xf32> to vector<8x128xf32>
    %23 = arith.addf %22, %17 : vector<8x128xf32>
    %c0_14 = arith.constant 0 : index
    %c0_15 = arith.constant 0 : index
    %c0_16 = arith.constant 0 : index
    %c0_17 = arith.constant 0 : index
    %24 = vector.load %arg3[%c0_14, %c0_15, %c0_16, %c0_17] : memref<1x2x8x128xf32, #tpu.memory_space<vmem>>, vector<1x1x8x128xf32>
    %25 = vector.shape_cast %24 : vector<1x1x8x128xf32> to vector<8x128xf32>
    %26 = vector.shape_cast %23 : vector<8x128xf32> to vector<1x1x8x128xf32>
    tpu.vector_store %arg3[%c0_14, %c0_15, %c0_16, %c0_17], %26 {strides = array<i32>} : memref<1x2x8x128xf32, #tpu.memory_space<vmem>>, vector<1x1x8x128xf32>,
    %c0_18 = arith.constant 0 : index
    %c1 = arith.constant 1 : index
    %c0_19 = arith.constant 0 : index
    %c0_20 = arith.constant 0 : index
    %27 = vector.load %arg3[%c0_18, %c1, %c0_19, %c0_20] : memref<1x2x8x128xf32, #tpu.memory_space<vmem>>, vector<1x1x8x128xf32>
    %28 = vector.shape_cast %27 : vector<1x1x8x128xf32> to vector<8x128xf32>
    %29 = arith.addf %28, %20 : vector<8x128xf32>
    %c0_21 = arith.constant 0 : index
    %c1_22 = arith.constant 1 : index
    %c0_23 = arith.constant 0 : index
    %c0_24 = arith.constant 0 : index
    %30 = vector.load %arg3[%c0_21, %c1_22, %c0_23, %c0_24] : memref<1x2x8x128xf32, #tpu.memory_space<vmem>>, vector<1x1x8x128xf32>
    %31 = vector.shape_cast %30 : vector<1x1x8x128xf32> to vector<8x128xf32>
    %32 = vector.shape_cast %29 : vector<8x128xf32> to vector<1x1x8x128xf32>
    tpu.vector_store %arg3[%c0_21, %c1_22, %c0_23, %c0_24], %32 {strides = array<i32>} : memref<1x2x8x128xf32, #tpu.memory_space<vmem>>, vector<1x1x8x128xf32>,
    return
  }
  func.func @transform_0(%arg0: i32) -> (i32, i32) {
    %c0_i32 = arith.constant 0 : i32
    %c0_i32_0 = arith.constant 0 : i32
    return %arg0, %c0_i32 : i32, i32
  }
  func.func @transform_1(%arg0: i32) -> (i32, i32) {
    %c0_i32 = arith.constant 0 : i32
    %c0_i32_0 = arith.constant 0 : i32
    return %arg0, %c0_i32 : i32, i32
  }
  func.func @transform_2(%arg0: i32) -> (i32, i32, i32, i32) {
    %c0_i32 = arith.constant 0 : i32
    %c0_i32_0 = arith.constant 0 : i32
    %c0_i32_1 = arith.constant 0 : i32
    %c0_i32_2 = arith.constant 0 : i32
    %c0_i32_3 = arith.constant 0 : i32
    return %c0_i32, %c0_i32_0, %c0_i32_1, %c0_i32_2 : i32, i32, i32, i32
  }
}

</mosaic_0001>

<llo_original>
// kernel: tpu_custom_call.1
$region0: #{tpu_custom_call.1}
  #allocation0 [shape = 'u32[]', space=smem, size = 0x4, offset = 0x4, fixed_abs, tag = 'smem constant byte address 0x4 - core index']
  #allocation1 [shape = 'u32[144,128]{1,0:T(1,128)}', space=vmem, size = 0x12000, scoped, tag = 'internal scratch']
  %s0 = inlined_call_operand.hbm [shape: f32[16,128], index: 0, kind: input, shape index: {}]
  %s1 = inlined_call_operand.hbm [shape: f32[16,128], index: 1, kind: input, shape index: {}]
  %s2 = inlined_call_operand.hbm [shape: f32[1,2,8,128], index: 2, kind: output, shape index: {}]
  %s3 = sld [smem:[#allocation0]]
  $region30: #{tpu_custom_call.1} parent=0
    _
  %s5 = ssub.s32 1, %s3
  %s6 = scalar_select 0, %s5, %s3
  $region1: #{tpu_custom_call.1} parent=0
    #allocation2 [shape = 'u8[8192]{0}', space=vmem, size = 0x2000, scoped, tag = 'input window, operand 0, single buffered']
    #allocation3 [shape = 's32[1]{0}', space=sflag, size = 0x4, scoped, tag = 'scoped memory for tpu_custom_call.1']
    #allocation4 [shape = 's32[1]{0}', space=sflag, size = 0x4, scoped, tag = 'scoped memory for tpu_custom_call.1']
    #allocation5 [shape = 'u8[8192]{0}', space=vmem, size = 0x2000, scoped, tag = 'input window, operand 1, single buffered']
    #allocation6 [shape = 's32[1]{0}', space=sflag, size = 0x4, scoped, tag = 'scoped memory for tpu_custom_call.1']
    #allocation7 [shape = 'u8[8192]{0}', space=vmem, size = 0x2000, scoped, tag = 'output window, operand 0, single buffered']
    %7 = vsyncpa [#allocation3], 0
    %8 = vsyncpa [#allocation6], 0
    %9 = vsyncpa [#allocation4], 0
    // Predicated region
    $region2: #{tpu_custom_call.1} parent=1 // pred_check
      _
    $region3: #{tpu_custom_call.1} parent=1 // pred_check_branch
      %11 = sbr.rel (0) target = $region5
    $region4: #{tpu_custom_call.1} parent=1 // pred_region
      %s13 = ssub.s32 256, 256
      %14 = vsyncadd [#allocation3], %s13
      %s15 = sshll.u32 [#allocation2], 4
      %s16 = int_to_ptr.vmem [resolvable:$true] %s15
      %21 = dma.hbm_to_vmem [thread:$0]  %s0, 256, %s16, [#allocation3], 128, 128, 8
    $region5: #{tpu_custom_call.1} parent=1 // pred_fallthru
      _
    // Predicated region
    $region6: #{tpu_custom_call.1} parent=1 // pred_check
      _
    $region7: #{tpu_custom_call.1} parent=1 // pred_check_branch
      %23 = sbr.rel (0) target = $region9
    $region8: #{tpu_custom_call.1} parent=1 // pred_region
      %s25 = ssub.s32 256, 256
      %26 = vsyncadd [#allocation6], %s25
      %s27 = sshll.u32 [#allocation5], 4
      %s28 = int_to_ptr.vmem [resolvable:$true] %s27
      %33 = dma.hbm_to_vmem [thread:$0]  %s1, 256, %s28, [#allocation6], 128, 128, 8
    $region9: #{tpu_custom_call.1} parent=1 // pred_fallthru
      _
    // Predicated region
    $region10: #{tpu_custom_call.1} parent=1 // pred_check
      _
    $region11: #{tpu_custom_call.1} parent=1 // pred_check_branch
      %35 = sbr.rel (0) target = $region13
    $region12: #{tpu_custom_call.1} parent=1 // pred_region
      %36 = dma.done [#allocation3], 256
    $region13: #{tpu_custom_call.1} parent=1 // pred_fallthru
      _
    // Predicated region
    $region14: #{tpu_custom_call.1} parent=1 // pred_check
      _
    $region15: #{tpu_custom_call.1} parent=1 // pred_check_branch
      %38 = sbr.rel (0) target = $region17
    $region16: #{tpu_custom_call.1} parent=1 // pred_region
      %39 = dma.done [#allocation6], 256
    $region17: #{tpu_custom_call.1} parent=1 // pred_fallthru
      _
    %p40 = scmp.eq.s32.totalorder 0, 0
    // Predicated region
    $region18: #{tpu_custom_call.1} parent=1 // pred_check
      %p41 = pneg %p40
    $region19: #{tpu_custom_call.1} parent=1 // pred_check_branch
      %43 = sbr.rel (%p41) target = $region21
    $region20: #{tpu_custom_call.1} parent=1 // pred_region
      %44 = vst [vmem:[#allocation7] sm:$0xff] 0.0
      %45 = vst [vmem:[#allocation7 + $0x8] sm:$0xff] 0.0
    $region21: #{tpu_custom_call.1} parent=1 // pred_fallthru
      _
    %v46 = vld [vmem:[#allocation5] sm:$0xff]
    %v47 = vld [vmem:[#allocation5 + $0x8] sm:$0xff]
    %v48 = vld [vmem:[#allocation2] sm:$0xff]
    %v49 = vld [vmem:[#allocation2 + $0x8] sm:$0xff]
    %vm50 = vcmp.gt.f32.partialorder %v46, 0.0
    %vm51 = vcmp.gt.f32.partialorder %v47, 0.0
    %v52 = vsub.f32 %v46, %v48
    %v53 = vsub.f32 %v47, %v49
    %v54 = vmul.f32 %v52, %v52
    %v55 = vmul.f32 %v53, %v53
    %v56 = vsel %vm50, %v54, 0.0
    %v57 = vsel %vm51, %v55, 0.0
    %v58 = vsel %vm50, 1.0, 0.0
    %v59 = vsel %vm51, 1.0, 0.0
    %v60 = vadd.f32 %v56, %v57
    %v61 = vadd.f32 %v60, 0.0
    %v62 = vadd.f32 %v58, %v59
    %v63 = vadd.f32 %v62, 0.0
    %v64 = vld [vmem:[#allocation7] sm:$0xff]
    %v65 = vadd.f32 %v64, %v61
    %66 = vst [vmem:[#allocation7] sm:$0xff] %v65
    %s67 = scalar_lea.vmem [#allocation7], 8
    %v68 = vld [vmem:[%s67] sm:$0xff]
    %v69 = vadd.f32 %v68, %v63
    %70 = vst [vmem:[%s67] sm:$0xff] %v69
    // Predicated region
    $region22: #{tpu_custom_call.1} parent=1 // pred_check
      _
    $region23: #{tpu_custom_call.1} parent=1 // pred_check_branch
      %72 = sbr.rel (0) target = $region25
    $region24: #{tpu_custom_call.1} parent=1 // pred_region
      %s74 = ssub.s32 256, 256
      %75 = vsyncadd [#allocation4], %s74
      %s76 = sshll.u32 [#allocation7], 4
      %s77 = int_to_ptr.vmem [resolvable:$true] %s76
      %82 = dma.vmem_to_hbm [thread:$0]  %s77, 256, %s2, [#allocation4], 128, 128, 8
    $region25: #{tpu_custom_call.1} parent=1 // pred_fallthru
      _
    // Predicated region
    $region26: #{tpu_custom_call.1} parent=1 // pred_check
      _
    $region27: #{tpu_custom_call.1} parent=1 // pred_check_branch
      %84 = sbr.rel (0) target = $region29
    $region28: #{tpu_custom_call.1} parent=1 // pred_region
      %85 = dma.done [#allocation4], 256
    $region29: #{tpu_custom_call.1} parent=1 // pred_fallthru
      _
    %86 = vsyncpa [#allocation3], 1
    %87 = vsyncpa [#allocation6], 1
    %88 = vsyncpa [#allocation4], 1

</llo_original>
